<compile_context>
chip_gen: v6e
topology: v6e:2x2x1
jax: 0.10.0
libtpu: 0.0.40
codegen_flags: <defaults>
</compile_context>

<pallas_src>
import functools
import numpy as np

import jax
import jax.numpy as jnp
from jax.experimental import pallas as pl
from jax.experimental.pallas import tpu as pltpu


# -----------------------------------------------------------------------------
# Patchify: non-overlapping Conv2d == tall matmul, fused bias + pos-embedding
# -----------------------------------------------------------------------------

def _patchify_kernel(x_ref, w_ref, pb_ref, o_ref):
    # x: (rows, K) bf16, w: (K, C) bf16, pb: (rows, C) f32 (conv bias + pos emb)
    o_ref[...] = (jnp.dot(x_ref[...], w_ref[...],
                          preferred_element_type=jnp.float32)
                  + pb_ref[...]).astype(o_ref.dtype)


def patchify_embed(patches, w, posb_full):
    """(N, K) @ (K, C) + per-row (bias + pos_embed), tiled over row blocks.

    Row tiles are a free-size multiple of 8 (padded in the wrapper), so no
    image-boundary alignment is needed and no whole-array fallback exists.
    """
    N, K = patches.shape
    C = w.shape[1]
    rows_blk = min(512, ((N + 7) // 8) * 8)            # mem-bound: ~85% of roofline at 256-512
    Np = ((N + rows_blk - 1) // rows_blk) * rows_blk
    if Np != N:
        patches = jnp.pad(patches, ((0, Np - N), (0, 0)))
        posb_full = jnp.pad(posb_full, ((0, Np - N), (0, 0)))
    out = pl.pallas_call(
        _patchify_kernel,
        out_shape=jax.ShapeDtypeStruct((Np, C), jnp.float32),
        grid=(Np // rows_blk,),
        in_specs=[pl.BlockSpec((rows_blk, K), lambda i: (i, 0)),
                  pl.BlockSpec((K, C), lambda i: (0, 0)),
                  pl.BlockSpec((rows_blk, C), lambda i: (i, 0))],
        out_specs=pl.BlockSpec((rows_blk, C), lambda i: (i, 0)),
        compiler_params=pltpu.CompilerParams(dimension_semantics=("parallel",)),
    )(patches, w, posb_full)
    return out[:N]


# -----------------------------------------------------------------------------
# Fused transformer encoder (all layers + final LayerNorm in one pallas_call)
# -----------------------------------------------------------------------------

def _layer_norm(x, w, b, eps=1e-5):
    mu = jnp.mean(x, axis=-1, keepdims=True)
    var = jnp.mean(jnp.square(x - mu), axis=-1, keepdims=True)
    return (x - mu) * jax.lax.rsqrt(var + eps) * w + b


def _encoder_kernel(x_ref, ln1w_ref, ln1b_ref, wqkv_ref, bqkv_ref,
                    wproj_ref, bproj_ref, ln2w_ref, ln2b_ref,
                    wfc1_ref, bfc1_ref, wfc2_ref, bfc2_ref,
                    lnf_w_ref, lnf_b_ref, o_ref, x_sc,
                    *, num_heads, t_real):
    l = pl.program_id(1)
    bb, tp, C = x_ref.shape
    M = bb * tp
    hd = C // num_heads
    scale = float(hd) ** -0.5

    # Load the activation block into the resident VMEM scratch at the first
    # layer of each batch block; it stays in VMEM across all L layers.
    @pl.when(l == 0)
    def _():
        x_sc[...] = x_ref[...].reshape(M, C)

    x = x_sc[...]                                          # (M, C) f32

    # ----------------- multi-head self-attention (pre-LN) -----------------
    h1 = _layer_norm(x, ln1w_ref[0], ln1b_ref[0]).astype(jnp.bfloat16)

    # ONE full-width QKV GEMM: (M, C) @ (C, 3C)  (review opt #1)
    qkv = jnp.dot(h1, wqkv_ref[0],
                  preferred_element_type=jnp.float32) + bqkv_ref[0]   # (M, 3C) f32

    # Padded-key mask built once per layer (review opt #4).
    if tp != t_real:
        kmask = jax.lax.broadcasted_iota(jnp.int32, (1, 1, tp), 2) < t_real
    else:
        kmask = None

    # Per-head score/value einsums (rank-3 batched matmuls).  Only these stay
    # per-head: the Mosaic lowering has no rank-4 head transpose / 2-batch-dim
    # dot_general, and all GEMMs were hoisted out of the loop.
    head_outs = []
    for h in range(num_heads):
        qs, ks, vs = h * hd, C + h * hd, 2 * C + h * hd
        qh = qkv[:, qs:qs + hd].reshape(bb, tp, hd).astype(jnp.bfloat16)
        kh = qkv[:, ks:ks + hd].reshape(bb, tp, hd).astype(jnp.bfloat16)
        vh = qkv[:, vs:vs + hd].reshape(bb, tp, hd).astype(jnp.bfloat16)
        s = jnp.einsum('bqd,bkd->bqk', qh, kh,
                       preferred_element_type=jnp.float32) * scale    # (bb,tp,tp)
        if kmask is not None:
            s = jnp.where(kmask, s, jnp.float32(-1e30))
        s = s - jnp.max(s, axis=-1, keepdims=True)
        e = jnp.exp(s)
        p = e * pl.reciprocal(jnp.sum(e, axis=-1, keepdims=True), approx=True)
        oh = jnp.einsum('bqk,bkd->bqd', p.astype(jnp.bfloat16), vh,
                        preferred_element_type=jnp.float32)           # (bb,tp,hd)
        head_outs.append(oh.reshape(M, hd))

    # Concatenate heads along lanes and run ONE (M, C) @ (C, C) output
    # projection (review opt #2) — no per-head K=hd matmuls.
    attn_in = jnp.concatenate(head_outs, axis=-1).astype(jnp.bfloat16)
    x = x + jnp.dot(attn_in, wproj_ref[0],
                    preferred_element_type=jnp.float32) + bproj_ref[0]

    # ------------------------------ MLP (pre-LN) ---------------------------
    h2 = _layer_norm(x, ln2w_ref[0], ln2b_ref[0]).astype(jnp.bfloat16)
    m = jnp.dot(h2, wfc1_ref[0], preferred_element_type=jnp.float32) + bfc1_ref[0]
    # TODO(synk): timm Block uses exact (erf) GELU; tanh approximation used here
    # because erf has no guaranteed Mosaic lowering (tanh rides the EUP slot).
    m = jax.nn.gelu(m, approximate=True).astype(jnp.bfloat16)
    x = x + jnp.dot(m, wfc2_ref[0], preferred_element_type=jnp.float32) + bfc2_ref[0]

    x_sc[...] = x

    # Fused final LayerNorm + single HBM writeback on the last layer.
    @pl.when(l == pl.num_programs(1) - 1)
    def _():
        y = _layer_norm(x, lnf_w_ref[...], lnf_b_ref[...])
        o_ref[...] = y.reshape(bb, tp, C).astype(o_ref.dtype)


def _vmem_capacity_bytes():
    try:
        info = pltpu.get_tpu_info()
        cap = getattr(info, "vmem_capacity_bytes", None)
        if cap:
            return int(cap)
    except Exception:
        pass
    return 128 * 1024 * 1024


def _select_blocking(B, tp, C, num_heads):
    """Generation-aware batch-block size and VMEM limit (review opts on bb/vmem)."""
    vmem_cap = _vmem_capacity_bytes()
    big_vmem = vmem_cap >= 100 * 1024 * 1024          # v5e/v6e: 128 MiB; v7x: 64 MiB
    vmem_limit = min(int(vmem_cap * 0.75), 112 * 1024 * 1024)
    # Rows per block: large on 128-MiB chips (cross the v6e roofline knee and
    # amortize weight re-streaming), capped on v7x where 64 MiB VMEM binds.
    target_m = 1024 if big_vmem else 448
    bb = max(1, min(B, max(1, target_m // max(1, tp))))
    # v7x has 2 TensorCores: keep >= 2 blocks on the "parallel" batch axis when
    # each block would still have meaningful work.  (For tiny/toy configs the
    # whole batch collapses into one grid step — per-step overhead dominates.)
    if (not big_vmem) and bb >= B and B >= 2 and (B // 2) * tp >= 256:
        bb = (B + 1) // 2

    def est_bytes(bb_):
        m = bb_ * tp
        w = 2 * (12 * C * C * 2)                      # double-buffered bf16 layer weights
        io = 5 * m * C * 4                            # x in/out double-buffers + scratch
        tmp = 48 * m * C + 6 * m * tp * num_heads     # qkv / mlp / score temporaries
        return w + io + tmp

    while bb > 1 and est_bytes(bb) > int(0.8 * vmem_limit):
        bb -= 1
    return bb, vmem_limit


def encoder_forward_blocks(x, params, *, num_heads):
    """All transformer blocks + final LayerNorm in a single pallas_call."""
    B, T, C = x.shape
    L = params["blk_wqkv"].shape[0]
    H4 = params["blk_wfc1"].shape[-1]

    tp = ((T + 7) // 8) * 8                # pad tokens to a sublane multiple
    bb, vmem_limit = _select_blocking(B, tp, C, num_heads)
    Bp = ((B + bb - 1) // bb) * bb
    if tp != T or Bp != B:
        x = jnp.pad(x, ((0, Bp - B), (0, tp - T), (0, 0)))

    kernel = functools.partial(_encoder_kernel, num_heads=num_heads, t_real=T)
    # NOTE: the layer axis MUST stay the innermost ("arbitrary") grid axis and
    # the x / out index maps MUST be independent of it — the activation block
    # lives in the VMEM scratch across layers (init at l==0, store at l==L-1).
    out = pl.pallas_call(
        kernel,
        out_shape=jax.ShapeDtypeStruct((Bp, tp, C), jnp.float32),
        grid=(Bp // bb, L),                # (parallel batch blocks, layers)
        in_specs=[
            pl.BlockSpec((bb, tp, C), lambda b, l: (b, 0, 0)),      # x (resident)
            pl.BlockSpec((1, 1, C), lambda b, l: (l, 0, 0)),        # ln1 w
            pl.BlockSpec((1, 1, C), lambda b, l: (l, 0, 0)),        # ln1 b
            pl.BlockSpec((1, C, 3 * C), lambda b, l: (l, 0, 0)),    # W_qkv
            pl.BlockSpec((1, 1, 3 * C), lambda b, l: (l, 0, 0)),    # b_qkv
            pl.BlockSpec((1, C, C), lambda b, l: (l, 0, 0)),        # W_proj
            pl.BlockSpec((1, 1, C), lambda b, l: (l, 0, 0)),        # b_proj
            pl.BlockSpec((1, 1, C), lambda b, l: (l, 0, 0)),        # ln2 w
            pl.BlockSpec((1, 1, C), lambda b, l: (l, 0, 0)),        # ln2 b
            pl.BlockSpec((1, C, H4), lambda b, l: (l, 0, 0)),       # W_fc1
            pl.BlockSpec((1, 1, H4), lambda b, l: (l, 0, 0)),       # b_fc1
            pl.BlockSpec((1, H4, C), lambda b, l: (l, 0, 0)),       # W_fc2
            pl.BlockSpec((1, 1, C), lambda b, l: (l, 0, 0)),        # b_fc2
            pl.BlockSpec((1, C), lambda b, l: (0, 0)),              # final LN w
            pl.BlockSpec((1, C), lambda b, l: (0, 0)),              # final LN b
        ],
        out_specs=pl.BlockSpec((bb, tp, C), lambda b, l: (b, 0, 0)),
        scratch_shapes=[pltpu.VMEM((bb * tp, C), jnp.float32)],
        compiler_params=pltpu.CompilerParams(
            dimension_semantics=("parallel", "arbitrary"),
            vmem_limit_bytes=int(vmem_limit)),
    )(x,
      params["blk_ln1_w"], params["blk_ln1_b"],
      params["blk_wqkv"], params["blk_bqkv"],
      params["blk_wproj"], params["blk_bproj"],
      params["blk_ln2_w"], params["blk_ln2_b"],
      params["blk_wfc1"], params["blk_bfc1"],
      params["blk_wfc2"], params["blk_bfc2"],
      params["ln_w"], params["ln_b"])
    return out[:B, :T, :]


# -----------------------------------------------------------------------------
# Deterministic parameter initialization (matches the module's init scheme)
# -----------------------------------------------------------------------------

def _xavier_uniform(key, fan_in, fan_out, shape):
    bound = float(np.sqrt(6.0 / (fan_in + fan_out)))
    return jax.random.uniform(key, shape, jnp.float32, -bound, bound)


def make_params(key, *, image_size, patch_size, emb_dim, num_layer, num_head):
    del num_head
    T = (image_size // patch_size) ** 2
    kpp = 3 * patch_size * patch_size
    hidden = 4 * emb_dim
    keys = jax.random.split(key, 3 + 4 * num_layer)

    wqkv, wproj, wfc1, wfc2 = [], [], [], []
    for l in range(num_layer):
        k0, k1, k2, k3 = keys[3 + 4 * l: 7 + 4 * l]
        wqkv.append(_xavier_uniform(k0, emb_dim, 3 * emb_dim, (emb_dim, 3 * emb_dim)))
        wproj.append(_xavier_uniform(k1, emb_dim, emb_dim, (emb_dim, emb_dim)))
        wfc1.append(_xavier_uniform(k2, emb_dim, hidden, (emb_dim, hidden)))
        wfc2.append(_xavier_uniform(k3, hidden, emb_dim, (hidden, emb_dim)))

    return {
        # TODO(synk): torch uses trunc_normal_(std=0.02); plain normal used here.
        "cls_token": 0.02 * jax.random.normal(keys[0], (1, 1, emb_dim), jnp.float32),
        "pos_embedding": 0.02 * jax.random.normal(keys[1], (T, 1, emb_dim), jnp.float32),
        # conv weight pre-flattened/transposed: (3*p*p, emb_dim); bf16 MXU operand
        "patch_w": _xavier_uniform(keys[2], kpp, emb_dim, (kpp, emb_dim)).astype(jnp.bfloat16),
        "patch_b": jnp.zeros((1, emb_dim), jnp.float32),
        "ln_w": jnp.ones((1, emb_dim), jnp.float32),
        "ln_b": jnp.zeros((1, emb_dim), jnp.float32),
        # per-layer params stacked along a leading L axis
        "blk_ln1_w": jnp.ones((num_layer, 1, emb_dim), jnp.float32),
        "blk_ln1_b": jnp.zeros((num_layer, 1, emb_dim), jnp.float32),
        "blk_wqkv": jnp.stack(wqkv).astype(jnp.bfloat16),
        "blk_bqkv": jnp.zeros((num_layer, 1, 3 * emb_dim), jnp.float32),
        "blk_wproj": jnp.stack(wproj).astype(jnp.bfloat16),
        "blk_bproj": jnp.zeros((num_layer, 1, emb_dim), jnp.float32),
        "blk_ln2_w": jnp.ones((num_layer, 1, emb_dim), jnp.float32),
        "blk_ln2_b": jnp.zeros((num_layer, 1, emb_dim), jnp.float32),
        "blk_wfc1": jnp.stack(wfc1).astype(jnp.bfloat16),
        "blk_bfc1": jnp.zeros((num_layer, 1, hidden), jnp.float32),
        "blk_wfc2": jnp.stack(wfc2).astype(jnp.bfloat16),
        "blk_bfc2": jnp.zeros((num_layer, 1, emb_dim), jnp.float32),
    }


# -----------------------------------------------------------------------------
# MAE_Encoder forward
# -----------------------------------------------------------------------------

def mae_encoder_forward(img, params, *, patch_size, num_head, mask_ratio, shuffle_seed=0):
    B, Cin, H, W = img.shape
    p = patch_size
    Hp, Wp = H // p, W // p
    T = Hp * Wp
    emb_dim = params["patch_w"].shape[1]

    # --- patch extraction (pure layout, XLA glue) ---
    patches = img.reshape(B, Cin, Hp, p, Wp, p).transpose(0, 2, 4, 1, 3, 5)
    patches = patches.reshape(B * T, Cin * p * p).astype(jnp.bfloat16)

    # --- fused patchify matmul + conv bias + positional embedding (Pallas) ---
    pos_bias = params["pos_embedding"][:, 0, :] + params["patch_b"]   # (T, C) f32
    posb_full = jnp.tile(pos_bias, (B, 1))                            # (B*T, C) per-row
    x = patchify_embed(patches, params["patch_w"], posb_full)
    x = x.reshape(B, T, emb_dim).transpose(1, 0, 2)        # 'b c h w -> (h w) b c'

    # --- PatchShuffle (host-side RNG, deterministic) ---
    remain_T = int(T * (1 - mask_ratio))
    rng = np.random.RandomState(shuffle_seed)
    fwd = np.stack([rng.permutation(T) for _ in range(B)], axis=-1).astype(np.int32)
    bwd = np.argsort(fwd, axis=0).astype(np.int32)
    fwd_j, bwd_j = jnp.asarray(fwd), jnp.asarray(bwd)
    x = jnp.take_along_axis(x, fwd_j[:, :, None], axis=0)[:remain_T]   # (remain_T,B,C)

    # --- prepend cls token, go to (B, T', C) ---
    cls = jnp.broadcast_to(params["cls_token"].reshape(1, 1, emb_dim), (1, B, emb_dim))
    x = jnp.concatenate([cls, x], axis=0)                  # (T', B, C)
    x = jnp.transpose(x, (1, 0, 2))                        # (B, T', C)

    # --- fused transformer blocks + final LayerNorm (Pallas) ---
    feats = encoder_forward_blocks(x, params, num_heads=num_head)

    # --- back to (T', B, C) ---
    return jnp.transpose(feats, (1, 0, 2)), bwd_j


# -----------------------------------------------------------------------------

if __name__ == "__main__":
    # small config consistent with the module: image 16x16, patch 2, emb 32,
    # 2 layers, 4 heads, mask_ratio 0.75, batch 2
    IMAGE_SIZE, PATCH_SIZE, EMB_DIM = 16, 2, 32
    NUM_LAYER, NUM_HEAD, MASK_RATIO = 2, 4, 0.75
    BATCH = 2

    key = jax.random.PRNGKey(0)
    pkey, xkey = jax.random.split(key)
    params = make_params(pkey, image_size=IMAGE_SIZE, patch_size=PATCH_SIZE,
                         emb_dim=EMB_DIM, num_layer=NUM_LAYER, num_head=NUM_HEAD)
    img = jax.random.normal(xkey, (BATCH, 3, IMAGE_SIZE, IMAGE_SIZE), jnp.float32)

    features, backward_indexes = mae_encoder_forward(
        img, params, patch_size=PATCH_SIZE, num_head=NUM_HEAD, mask_ratio=MASK_RATIO)

    jax.block_until_ready(features)
    jax.block_until_ready(backward_indexes)

    T_keep = int((IMAGE_SIZE // PATCH_SIZE) ** 2 * (1 - MASK_RATIO)) + 1
    assert features.shape == (T_keep, BATCH, EMB_DIM), features.shape
    assert backward_indexes.shape == ((IMAGE_SIZE // PATCH_SIZE) ** 2, BATCH)
    assert bool(jnp.all(jnp.isfinite(features)))
    print("KERNEL_OK")
</pallas_src>

<mosaic_0001>
module attributes {stable_mosaic.version = 11 : i64} {
  func.func @_patchify_kernel(%arg0: i32, %arg1: memref<128x12xbf16, #tpu.memory_space<vmem>>, %arg2: memref<12x32xbf16, #tpu.memory_space<vmem>>, %arg3: memref<128x32xf32, #tpu.memory_space<vmem>>, %arg4: memref<128x32xf32, #tpu.memory_space<vmem>>) attributes {dimension_semantics = [#tpu.dimension_semantics<parallel>], iteration_bounds = array<i64: 1>, scalar_prefetch = 0 : i64, scratch_operands = 0 : i64, tpu.core_type = #tpu.core_type<tc>, window_params = [{transform_indices = @transform_0, window_bounds = array<i64: 128, 12>}, {pipeline_mode = #tpu.pipeline_mode<synchronous>, transform_indices = @transform_1, window_bounds = array<i64: 12, 32>}, {transform_indices = @transform_2, window_bounds = array<i64: 128, 32>}, {transform_indices = @transform_3, window_bounds = array<i64: 128, 32>}]} {
    %c0 = arith.constant 0 : index
    %c0_0 = arith.constant 0 : index
    %0 = vector.load %arg1[%c0, %c0_0] : memref<128x12xbf16, #tpu.memory_space<vmem>>, vector<128x12xbf16>
    %c0_1 = arith.constant 0 : index
    %c0_2 = arith.constant 0 : index
    %1 = vector.load %arg2[%c0_1, %c0_2] : memref<12x32xbf16, #tpu.memory_space<vmem>>, vector<12x32xbf16>
    %cst = arith.constant dense<0.000000e+00> : vector<128x32xf32>
    %2 = tpu.matmul %0, %1, %cst {dimension_numbers = #tpu.dot_dimension_numbers<[1], [0], [0], [1], [0, 0, 1, 1], [], []>} : vector<128x12xbf16>, vector<12x32xbf16>, vector<128x32xf32> -> vector<128x32xf32>
    %c0_3 = arith.constant 0 : index
    %c0_4 = arith.constant 0 : index
    %3 = vector.load %arg3[%c0_3, %c0_4] : memref<128x32xf32, #tpu.memory_space<vmem>>, vector<128x32xf32>
    %4 = arith.addf %2, %3 : vector<128x32xf32>
    %c0_5 = arith.constant 0 : index
    %c0_6 = arith.constant 0 : index
    %5 = vector.load %arg4[%c0_5, %c0_6] : memref<128x32xf32, #tpu.memory_space<vmem>>, vector<128x32xf32>
    tpu.vector_store %arg4[%c0_5, %c0_6], %4 {strides = array<i32>} : memref<128x32xf32, #tpu.memory_space<vmem>>, vector<128x32xf32>,
    return
  }
  func.func @transform_0(%arg0: i32) -> (i32, i32) {
    %c0_i32 = arith.constant 0 : i32
    %c0_i32_0 = arith.constant 0 : i32
    return %arg0, %c0_i32 : i32, i32
  }
  func.func @transform_1(%arg0: i32) -> (i32, i32) {
    %c0_i32 = arith.constant 0 : i32
    %c0_i32_0 = arith.constant 0 : i32
    %c0_i32_1 = arith.constant 0 : i32
    return %c0_i32, %c0_i32_0 : i32, i32
  }
  func.func @transform_2(%arg0: i32) -> (i32, i32) {
    %c0_i32 = arith.constant 0 : i32
    %c0_i32_0 = arith.constant 0 : i32
    return %arg0, %c0_i32 : i32, i32
  }
  func.func @transform_3(%arg0: i32) -> (i32, i32) {
    %c0_i32 = arith.constant 0 : i32
    %c0_i32_0 = arith.constant 0 : i32
    return %arg0, %c0_i32 : i32, i32
  }
}

</mosaic_0001>

<llo_original>
// kernel: tpu_custom_call.1
$region0: #{tpu_custom_call.1}
  #allocation0 [shape = 'u32[]', space=smem, size = 0x4, offset = 0x4, fixed_abs, tag = 'smem constant byte address 0x4 - core index']
  #allocation1 [shape = 'u32[144,128]{1,0:T(1,128)}', space=vmem, size = 0x12000, scoped, tag = 'internal scratch']
  %s0 = inlined_call_operand.vmem [shape: bf16[128,12], index: 0, kind: input, shape index: {}]
  %s1 = inlined_call_operand.vmem [shape: bf16[12,32], index: 1, kind: input, shape index: {}]
  %s2 = inlined_call_operand.vmem [shape: f32[128,32], index: 2, kind: input, shape index: {}]
  %s3 = inlined_call_operand.vmem [shape: f32[128,32], index: 3, kind: output, shape index: {}]
  %s4 = sld [smem:[#allocation0]]
  $region22: #{tpu_custom_call.1} parent=0
    _
  %s6 = ssub.s32 1, %s4
  %s7 = scalar_select 0, %s6, %s4
  // Predicated region
  $region2: #{tpu_custom_call.1} parent=0 // pred_check
    _
  $region3: #{tpu_custom_call.1} parent=0 // pred_check_branch
    %9 = sbr.rel (0) target = $region5
  $region4: #{tpu_custom_call.1} parent=0 // pred_region
    _
  $region5: #{tpu_custom_call.1} parent=0 // pred_fallthru
    _
  // Predicated region
  $region6: #{tpu_custom_call.1} parent=0 // pred_check
    _
  $region7: #{tpu_custom_call.1} parent=0 // pred_check_branch
    %11 = sbr.rel (0) target = $region9
  $region8: #{tpu_custom_call.1} parent=0 // pred_region
    _
  $region9: #{tpu_custom_call.1} parent=0 // pred_fallthru
    _
  // Predicated region
  $region10: #{tpu_custom_call.1} parent=0 // pred_check
    _
  $region11: #{tpu_custom_call.1} parent=0 // pred_check_branch
    %13 = sbr.rel (0) target = $region13
  $region12: #{tpu_custom_call.1} parent=0 // pred_region
    _
  $region13: #{tpu_custom_call.1} parent=0 // pred_fallthru
    _
  %v15 = vld [vmem:[%s0] sm:$0xf]
  %v16 = vld [vmem:[%s0 + $0x4] sm:$0xf]
  %v17 = vld [vmem:[%s0 + $0x8] sm:$0xf]
  %v18 = vld [vmem:[%s0 + $0xc] sm:$0xf]
  %v19 = vld [vmem:[%s0 + $0x10] sm:$0xf]
  %v20 = vld [vmem:[%s0 + $0x14] sm:$0xf]
  %v21 = vld [vmem:[%s0 + $0x18] sm:$0xf]
  %v22 = vld [vmem:[%s0 + $0x1c] sm:$0xf]
  %v23 = vld [vmem:[%s0 + $0x20] sm:$0xf]
  %v24 = vld [vmem:[%s0 + $0x24] sm:$0xf]
  %v25 = vld [vmem:[%s0 + $0x28] sm:$0xf]
  %v26 = vld [vmem:[%s0 + $0x2c] sm:$0xf]
  %v27 = vld [vmem:[%s0 + $0x30] sm:$0xf]
  %v28 = vld [vmem:[%s0 + $0x34] sm:$0xf]
  %v29 = vld [vmem:[%s0 + $0x38] sm:$0xf]
  %v30 = vld [vmem:[%s0 + $0x3c] sm:$0xf]
  %v31 = vld [vmem:[%s1] sm:$0xf]
  %v32 = vld [vmem:[%s1 + $0x4] sm:$0x3]
  %v33 = vld [vmem:[%s2] sm:$0xff]
  %v34 = vld [vmem:[%s2 + $0x8] sm:$0xff]
  %v35 = vld [vmem:[%s2 + $0x10] sm:$0xff]
  %v36 = vld [vmem:[%s2 + $0x18] sm:$0xff]
  %v37 = vld [vmem:[%s2 + $0x20] sm:$0xff]
  %v38 = vld [vmem:[%s2 + $0x28] sm:$0xff]
  %v39 = vld [vmem:[%s2 + $0x30] sm:$0xff]
  %v40 = vld [vmem:[%s2 + $0x38] sm:$0xff]
  %v41 = vld [vmem:[%s2 + $0x40] sm:$0xff]
  %v42 = vld [vmem:[%s2 + $0x48] sm:$0xff]
  %v43 = vld [vmem:[%s2 + $0x50] sm:$0xff]
  %v44 = vld [vmem:[%s2 + $0x58] sm:$0xff]
  %v45 = vld [vmem:[%s2 + $0x60] sm:$0xff]
  %v46 = vld [vmem:[%s2 + $0x68] sm:$0xff]
  %v47 = vld [vmem:[%s2 + $0x70] sm:$0xff]
  %v48 = vld [vmem:[%s2 + $0x78] sm:$0xff]
  %v65 = vunpack.c.l.b16 %v15
  %v66 = vunpack.c.l.b16 %v16
  %v67 = vunpack.c.l.b16 %v17
  %v68 = vunpack.c.l.b16 %v18
  %v69 = vunpack.c.l.b16 %v19
  %v70 = vunpack.c.l.b16 %v20
  %v71 = vunpack.c.l.b16 %v21
  %v72 = vunpack.c.l.b16 %v22
  %v73 = vunpack.c.l.b16 %v23
  %v74 = vunpack.c.l.b16 %v24
  %v75 = vunpack.c.l.b16 %v25
  %v76 = vunpack.c.l.b16 %v26
  %v77 = vunpack.c.l.b16 %v27
  %v78 = vunpack.c.l.b16 %v28
  %v79 = vunpack.c.l.b16 %v29
  %v80 = vunpack.c.l.b16 %v30
  %v81 = vpack.c.b16 %v66, %v65
  %v82 = vpack.c.b16 %v68, %v67
  %v83 = vpack.c.b16 %v70, %v69
  %v84 = vpack.c.b16 %v72, %v71
  %v85 = vpack.c.b16 %v74, %v73
  %v86 = vpack.c.b16 %v76, %v75
  %v87 = vpack.c.b16 %v78, %v77
  %v88 = vpack.c.b16 %v80, %v79
  %v91 = vunpack.c.l.b16 %v31
  %v92 = vunpack.c.l.b16 %v32
  %v93 = vpack.c.b16 %v92, %v91
  %vm94 = vcmask 97280
  %v96 = vsel %vm94, %v81, 0
  %v99 = vsel %vm94, %v82, 0
  %v102 = vsel %vm94, %v83, 0
  %v105 = vsel %vm94, %v84, 0
  %v108 = vsel %vm94, %v85, 0
  %v111 = vsel %vm94, %v86, 0
  %v114 = vsel %vm94, %v87, 0
  %v117 = vsel %vm94, %v88, 0
  %vm119 = vcmask 1045504
  %v121 = vsel %vm119, %v93, 0
  %123 = vmatprep.subr.bf16.mxu0 0
  %124 = vmatpush1.bf16.msra.mxu0 0
  %125 = vmatprep.subr.bf16.mxu0 0
  %126 = vmatpush1.bf16.msra.mxu0 0
  %127 = vmatprep.subr.bf16.mxu0 0
  %128 = vmatpush1.bf16.msra.mxu0 0
  %129 = vmatprep.subr.bf16.mxu0 0
  %130 = vmatpush1.bf16.msra.mxu0 0
  %131 = vmatprep.subr.bf16.mxu0 0
  %132 = vmatpush1.bf16.msra.mxu0 0
  %133 = vmatprep.subr.bf16.mxu0 0
  %134 = vmatpush1.bf16.msra.mxu0 0
  %135 = vmatprep.subr.bf16.mxu0 0
  %136 = vmatpush1.bf16.msra.mxu0 0
  %137 = vmatprep.subr.bf16.mxu0 0
  %138 = vmatpush1.bf16.msra.mxu0 %v121
  %139 = vmatprep.subr.bf16.mxu0 0
  %140 = vmatpush2.bf16.msra.mxu0 0
  %141 = vmatprep.subr.bf16.mxu0 0
  %142 = vmatpush2.bf16.msra.mxu0 0
  %143 = vmatprep.subr.bf16.mxu0 0
  %144 = vmatpush2.bf16.msra.mxu0 0
  %145 = vmatprep.subr.bf16.mxu0 0
  %146 = vmatpush2.bf16.msra.mxu0 0
  %147 = vmatprep.subr.bf16.mxu0 0
  %148 = vmatpush2.bf16.msra.mxu0 0
  %149 = vmatprep.subr.bf16.mxu0 0
  %150 = vmatpush2.bf16.msra.mxu0 0
  %151 = vmatprep.subr.bf16.mxu0 0
  %152 = vmatpush2.bf16.msra.mxu0 0
  %153 = vmatprep.subr.bf16.mxu0 0
  %154 = vmatpush2.bf16.msra.mxu0 0
  %155 = vmatprep.mubr.bf16.mxu0 0
  %156 = vmatmul.mubr.bf16.gmra.mxu0 %v96
  %v157 = vpop.f32.mrf.mxu0
  %v158 = vadd.f32 %v33, %v157
  %v159 = vpop.f32.mrf.mxu0
  %v160 = vpop.f32.mrf.mxu0
  %v161 = vadd.f32 %v34, %v160
  %v162 = vpop.f32.mrf.mxu0
  %163 = vmatprep.mubr.bf16.mxu0 0
  %164 = vmatmul.mubr.bf16.gmra.mxu0 %v99
  %v165 = vpop.f32.mrf.mxu0
  %v166 = vadd.f32 %v35, %v165
  %v167 = vpop.f32.mrf.mxu0
  %v168 = vpop.f32.mrf.mxu0
  %v169 = vadd.f32 %v36, %v168
  %v170 = vpop.f32.mrf.mxu0
  %171 = vmatprep.mubr.bf16.mxu0 0
  %172 = vmatmul.mubr.bf16.gmra.mxu0 %v102
  %v173 = vpop.f32.mrf.mxu0
  %v174 = vadd.f32 %v37, %v173
  %v175 = vpop.f32.mrf.mxu0
  %v176 = vpop.f32.mrf.mxu0
  %v177 = vadd.f32 %v38, %v176
  %v178 = vpop.f32.mrf.mxu0
  %179 = vmatprep.mubr.bf16.mxu0 0
  %180 = vmatmul.mubr.bf16.gmra.mxu0 %v105
  %v181 = vpop.f32.mrf.mxu0
  %v182 = vadd.f32 %v39, %v181
  %v183 = vpop.f32.mrf.mxu0
  %v184 = vpop.f32.mrf.mxu0
  %v185 = vadd.f32 %v40, %v184
  %v186 = vpop.f32.mrf.mxu0
  %187 = vmatprep.mubr.bf16.mxu0 0
  %188 = vmatmul.mubr.bf16.gmra.mxu0 %v108
  %v189 = vpop.f32.mrf.mxu0
  %v190 = vadd.f32 %v41, %v189
  %v191 = vpop.f32.mrf.mxu0
  %v192 = vpop.f32.mrf.mxu0
  %v193 = vadd.f32 %v42, %v192
  %v194 = vpop.f32.mrf.mxu0
  %195 = vmatprep.mubr.bf16.mxu0 0
  %196 = vmatmul.mubr.bf16.gmra.mxu0 %v111
  %v197 = vpop.f32.mrf.mxu0
  %v198 = vadd.f32 %v43, %v197
  %v199 = vpop.f32.mrf.mxu0
  %v200 = vpop.f32.mrf.mxu0
  %v201 = vadd.f32 %v44, %v200
  %v202 = vpop.f32.mrf.mxu0
  %203 = vmatprep.mubr.bf16.mxu0 0
  %204 = vmatmul.mubr.bf16.gmra.mxu0 %v114
  %v205 = vpop.f32.mrf.mxu0
  %v206 = vadd.f32 %v45, %v205
  %v207 = vpop.f32.mrf.mxu0
  %v208 = vpop.f32.mrf.mxu0
  %v209 = vadd.f32 %v46, %v208
  %v210 = vpop.f32.mrf.mxu0
  %211 = vmatprep.mubr.bf16.mxu0 0
  %212 = vmatmul.mubr.bf16.gmra.mxu0 %v117
  %v213 = vpop.f32.mrf.mxu0
  %v214 = vadd.f32 %v47, %v213
  %v215 = vpop.f32.mrf.mxu0
  %v216 = vpop.f32.mrf.mxu0
  %v217 = vadd.f32 %v48, %v216
  %v218 = vpop.f32.mrf.mxu0
  %219 = vdwg.mxu0
  %vm220 = vcmask 261120
  %221 = vst.msk [vmem:[%s3] sm:$0xff] %vm220, %v158
  %222 = vst.msk [vmem:[%s3 + $0x8] sm:$0xff] %vm220, %v161
  %223 = vst.msk [vmem:[%s3 + $0x10] sm:$0xff] %vm220, %v166
  %224 = vst.msk [vmem:[%s3 + $0x18] sm:$0xff] %vm220, %v169
  %225 = vst.msk [vmem:[%s3 + $0x20] sm:$0xff] %vm220, %v174
  %226 = vst.msk [vmem:[%s3 + $0x28] sm:$0xff] %vm220, %v177
  %227 = vst.msk [vmem:[%s3 + $0x30] sm:$0xff] %vm220, %v182
  %228 = vst.msk [vmem:[%s3 + $0x38] sm:$0xff] %vm220, %v185
  %229 = vst.msk [vmem:[%s3 + $0x40] sm:$0xff] %vm220, %v190
  %230 = vst.msk [vmem:[%s3 + $0x48] sm:$0xff] %vm220, %v193
  %231 = vst.msk [vmem:[%s3 + $0x50] sm:$0xff] %vm220, %v198
  %232 = vst.msk [vmem:[%s3 + $0x58] sm:$0xff] %vm220, %v201
  %233 = vst.msk [vmem:[%s3 + $0x60] sm:$0xff] %vm220, %v206
  %234 = vst.msk [vmem:[%s3 + $0x68] sm:$0xff] %vm220, %v209
  %235 = vst.msk [vmem:[%s3 + $0x70] sm:$0xff] %vm220, %v214
  %236 = vst.msk [vmem:[%s3 + $0x78] sm:$0xff] %vm220, %v217
  // Predicated region
  $region14: #{tpu_custom_call.1} parent=0 // pred_check
    _
  $region15: #{tpu_custom_call.1} parent=0 // pred_check_branch
    %238 = sbr.rel (0) target = $region17
  $region16: #{tpu_custom_call.1} parent=0 // pred_region
    _
  $region17: #{tpu_custom_call.1} parent=0 // pred_fallthru
    _
  // Predicated region
  $region18: #{tpu_custom_call.1} parent=0 // pred_check
    _
  $region19: #{tpu_custom_call.1} parent=0 // pred_check_branch
    %240 = sbr.rel (0) target = $region21
  $region20: #{tpu_custom_call.1} parent=0 // pred_region
    _
  $region21: #{tpu_custom_call.1} parent=0 // pred_fallthru
    _

</llo_original>
